<compile_context>
chip_gen: v7x
topology: tpu7x:2x2x1
jax: 0.10.0
libtpu: 0.0.40
codegen_flags: <defaults>
</compile_context>

<pallas_src>
import functools

import jax
import jax.numpy as jnp
from jax import lax
from jax.experimental import pallas as pl
from jax.experimental.pallas import tpu as pltpu


_LANE_W = 512  # lane-dense flattened row width (multiple of 128)


def _num_tensorcores():
    """Best-effort TensorCores-per-chip query; conservatively defaults to 1."""
    try:
        info = pltpu.get_tpu_info()
    except Exception:
        return 1
    for name in ("num_tensorcores", "tensorcore_count", "num_tensor_cores",
                 "tensorcores_per_chip", "num_cores", "core_count"):
        v = getattr(info, name, None)
        if v is None:
            continue
        try:
            v = int(v)
        except Exception:
            continue
        if v in (1, 2):       # TPU chips have at most 2 TensorCores
            return v
    return 1


def _myloss_kernel(pred_ref, truth_ref, acc_ref, *, tile_rows, chunk_rows,
                   tiles_per_core, total_rows, lane_w):
    """Grid = (core, row_tile). Each core folds its partial sum-of-squares into
    its resident (1, 8, lane_w) f32 output block; axis 1 is the reduction."""
    c = pl.program_id(0)   # core axis (CORE_PARALLEL on multi-TC chips)
    i = pl.program_id(1)   # row-tile reduction axis ("arbitrary")

    @pl.when(i == 0)
    def _():
        acc_ref[...] = jnp.zeros_like(acc_ref)

    # Unclamped logical block index: detects the ragged tail block and fully
    # masks the clamped duplicate block created by odd per-core splits.
    block_idx = c * tiles_per_core + i
    row0 = block_idx * tile_rows
    n_chunks = tile_rows // chunk_rows

    def fold(masked):
        def body(k, carry):
            r = pl.multiple_of(k * chunk_rows, chunk_rows)
            p = pred_ref[pl.ds(r, chunk_rows), :].astype(jnp.float32)
            t = truth_ref[pl.ds(r, chunk_rows), :].astype(jnp.float32)
            diff = p - t
            if masked:
                rows = row0 + r + lax.broadcasted_iota(
                    jnp.int32, (chunk_rows, 1), 0)
                diff = jnp.where(rows < total_rows, diff, 0.0)
            sq = diff * diff
            # VPU-only fold of 8-sublane groups onto the vreg-resident carry.
            return carry + sq.reshape(chunk_rows // 8, 8, lane_w).sum(axis=0)

        return lax.fori_loop(0, n_chunks, body,
                             jnp.zeros((8, lane_w), jnp.float32))

    needs_mask = row0 + tile_rows > total_rows

    @pl.when(needs_mask)                    # tail / clamped duplicate block only
    def _():
        acc_ref[0] += fold(masked=True)

    @pl.when(jnp.logical_not(needs_mask))   # interior blocks: no per-element mask
    def _():
        acc_ref[0] += fold(masked=False)


def _flatten_lane_dense(x, lane_w):
    """Flatten to (R, lane_w); zero-pad the tail (zeros cancel in pred-truth)."""
    n = x.size
    flat = x.reshape(-1)
    padded_n = pl.cdiv(n, lane_w) * lane_w
    if padded_n != n:
        flat = jnp.pad(flat, (0, padded_n - n))
    return flat.reshape(padded_n // lane_w, lane_w)


def my_loss(pred, truth, *, tile_rows=None, num_cores=None,
            target_block_bytes=4 * 1024 * 1024, lane_w=_LANE_W):
    assert pred.shape == truth.shape
    n_elems = pred.size
    itemsize = jnp.dtype(pred.dtype).itemsize

    p2 = _flatten_lane_dense(pred, lane_w)
    t2 = _flatten_lane_dense(truth, lane_w)
    rows_total = p2.shape[0]

    pack = max(8, 32 // itemsize)            # sublane pack: 8 f32 / 16 bf16 / 32 int8
    if tile_rows is None:
        desired = max(pack, target_block_bytes // (lane_w * itemsize))
        desired = (desired // pack) * pack
        r_cap = pl.cdiv(rows_total, pack) * pack
        tile_rows = int(min(desired, r_cap))
    assert tile_rows % pack == 0 and tile_rows >= 8

    # Inner-loop chunk: largest of {128,64,32,16,8} that divides the tile and
    # respects the dtype's sublane pack (bounds in-kernel VMEM temporaries).
    chunk_rows = tile_rows
    for cand in (128, 64, 32, 16, 8):
        if pack <= cand <= tile_rows and tile_rows % cand == 0:
            chunk_rows = cand
            break

    num_row_blocks = pl.cdiv(rows_total, tile_rows)
    detected_cores = _num_tensorcores()
    if num_cores is None:
        num_cores = detected_cores if num_row_blocks >= detected_cores else 1
    num_cores = int(max(1, min(num_cores, num_row_blocks)))
    tiles_per_core = pl.cdiv(num_row_blocks, num_cores)
    last_block = num_row_blocks - 1

    # Real cross-TC split only when the leading axis matches the physical core
    # count; otherwise it is just a (serial, size-1 on 1-TC chips) extra axis.
    core_sem = (pltpu.CORE_PARALLEL
                if (num_cores > 1 and num_cores == detected_cores)
                else pltpu.ARBITRARY)

    kernel = functools.partial(
        _myloss_kernel,
        tile_rows=tile_rows,
        chunk_rows=chunk_rows,
        tiles_per_core=tiles_per_core,
        total_rows=rows_total,
        lane_w=lane_w,
    )

    def in_map(c, i):
        # Clamp duplicated overflow blocks (odd split across cores); they are
        # fully masked inside the kernel so they contribute zero.
        return (jnp.minimum(c * tiles_per_core + i, last_block), 0)

    block_bytes = tile_rows * lane_w * itemsize
    vmem_limit = int(min(48 * 1024 * 1024,
                         2 * 2 * block_bytes + 8 * 1024 * 1024))

    cost = pl.CostEstimate(
        flops=3 * n_elems,
        transcendentals=0,
        bytes_accessed=2 * n_elems * itemsize + num_cores * 8 * lane_w * 4,
    )

    partials = pl.pallas_call(
        kernel,
        out_shape=jax.ShapeDtypeStruct((num_cores, 8, lane_w), jnp.float32),
        grid_spec=pltpu.PrefetchScalarGridSpec(
            num_scalar_prefetch=0,
            grid=(num_cores, tiles_per_core),
            in_specs=[
                pl.BlockSpec((tile_rows, lane_w), in_map),
                pl.BlockSpec((tile_rows, lane_w), in_map),
            ],
            out_specs=pl.BlockSpec((1, 8, lane_w), lambda c, i: (c, 0, 0)),
        ),
        compiler_params=pltpu.CompilerParams(
            dimension_semantics=(core_sem, pltpu.ARBITRARY),
            vmem_limit_bytes=vmem_limit,
        ),
        cost_estimate=cost,
    )(p2, t2)

    # Single cross-lane collapse + sqrt, outside the hot loop.
    total = jnp.sum(partials)
    return jnp.sqrt(total) / jnp.sqrt(jnp.float32(n_elems))


if __name__ == "__main__":
    def ref_loss(pred, truth):
        c = pred.astype(jnp.float32) - truth.astype(jnp.float32)
        return jnp.sqrt(jnp.sum(c * c)) / jnp.sqrt(jnp.float32(c.size))

    key = jax.random.PRNGKey(0)
    cases = [
        # (shape, dtype, kwargs)
        ((16, 128), jnp.float32, {}),                    # single padded block
        ((20, 300), jnp.float32, {}),                    # odd width -> lane pad + tail mask
        ((7, 64, 33), jnp.float32, {}),                  # n-d input, flatten + pad
        ((256, 256), jnp.float32, dict(tile_rows=32)),   # multi-step reduction
        ((300, 256), jnp.float32, dict(tile_rows=32, num_cores=2)),  # odd split -> clamped dup block
        ((64, 256), jnp.bfloat16, {}),                   # packed dtype, f32 accumulation
    ]
    for shape, dtype, kw in cases:
        key, k1, k2 = jax.random.split(key, 3)
        pred = jax.random.normal(k1, shape, dtype=jnp.float32).astype(dtype)
        truth = jax.random.normal(k2, shape, dtype=jnp.float32).astype(dtype)
        d = jax.block_until_ready(my_loss(pred, truth, **kw))
        r = ref_loss(pred, truth)
        assert jnp.allclose(d, r, rtol=1e-5, atol=1e-6), (shape, dtype, kw, d, r)
    print("KERNEL_OK")
</pallas_src>

<mosaic_0001>
module attributes {stable_mosaic.version = 11 : i64} {
  func.func @_myloss_kernel(%arg0: i32, %arg1: i32, %arg2: memref<8x512xf32, #tpu.memory_space<vmem>>, %arg3: memref<8x512xf32, #tpu.memory_space<vmem>>, %arg4: memref<1x8x512xf32, #tpu.memory_space<vmem>>) attributes {dimension_semantics = [#tpu.dimension_semantics<arbitrary>, #tpu.dimension_semantics<arbitrary>], iteration_bounds = array<i64: 1, 1>, scalar_prefetch = 0 : i64, scratch_operands = 0 : i64, tpu.core_type = #tpu.core_type<tc>, window_params = [{transform_indices = @transform_0, window_bounds = array<i64: 8, 512>}, {transform_indices = @transform_1, window_bounds = array<i64: 8, 512>}, {transform_indices = @transform_2, window_bounds = array<i64: 1, 8, 512>}]} {
    %c0_i32 = arith.constant 0 : i32
    %0 = arith.cmpi eq, %arg1, %c0_i32 : i32
    %1 = arith.extui %0 : i1 to i32
    %c0_i32_0 = arith.constant 0 : i32
    %2 = arith.cmpi ne, %1, %c0_i32_0 : i32
    scf.if %2 {
      %cst = arith.constant 0.000000e+00 : f32
      %13 = vector.broadcast %cst : f32 to vector<1x8x512xf32>
      %c0 = arith.constant 0 : index
      %c0_4 = arith.constant 0 : index
      %c0_5 = arith.constant 0 : index
      %14 = vector.load %arg4[%c0, %c0_4, %c0_5] : memref<1x8x512xf32, #tpu.memory_space<vmem>>, vector<1x8x512xf32>
      tpu.vector_store %arg4[%c0, %c0_4, %c0_5], %13 {strides = array<i32>} : memref<1x8x512xf32, #tpu.memory_space<vmem>>, vector<1x8x512xf32>,
    } else {
    }
    %c1_i32 = arith.constant 1 : i32
    %3 = arith.muli %arg0, %c1_i32 : i32
    %4 = arith.addi %3, %arg1 : i32
    %c8_i32 = arith.constant 8 : i32
    %5 = arith.muli %4, %c8_i32 : i32
    %c8_i32_1 = arith.constant 8 : i32
    %6 = arith.addi %5, %c8_i32_1 : i32
    %c4_i32 = arith.constant 4 : i32
    %7 = arith.cmpi sgt, %6, %c4_i32 : i32
    %8 = arith.extui %7 : i1 to i32
    %c0_i32_2 = arith.constant 0 : i32
    %9 = arith.cmpi ne, %8, %c0_i32_2 : i32
    scf.if %9 {
      %c0 = arith.constant 0 : index
      %c0_4 = arith.constant 0 : index
      %c0_5 = arith.constant 0 : index
      %13 = vector.load %arg4[%c0, %c0_4, %c0_5] : memref<1x8x512xf32, #tpu.memory_space<vmem>>, vector<1x8x512xf32>
      %14 = vector.shape_cast %13 : vector<1x8x512xf32> to vector<8x512xf32>
      %cst = arith.constant 0.000000e+00 : f32
      %15 = vector.broadcast %cst : f32 to vector<8x512xf32>
      %c0_i32_6 = arith.constant 0 : i32
      %c8_i32_7 = arith.constant 8 : i32
      %16 = arith.muli %c0_i32_6, %c8_i32_7 : i32
      %17 = tpu.assume_multiple %16, 8 : i32
      %18 = arith.index_cast %17 : i32 to index
      %c0_8 = arith.constant 0 : index
      %19 = vector.load %arg2[%18, %c0_8] : memref<8x512xf32, #tpu.memory_space<vmem>>, vector<8x512xf32>
      %20 = arith.index_cast %17 : i32 to index
      %c0_9 = arith.constant 0 : index
      %21 = vector.load %arg3[%20, %c0_9] : memref<8x512xf32, #tpu.memory_space<vmem>>, vector<8x512xf32>
      %22 = arith.subf %19, %21 : vector<8x512xf32>
      %23 = arith.addi %5, %17 : i32
      %24 = tpu.iota {dimensions = array<i32: 0>} : vector<8x1xi32>
      %25 = vector.broadcast %23 : i32 to vector<8x1xi32>
      %26 = arith.addi %25, %24 : vector<8x1xi32>
      %c4_i32_10 = arith.constant 4 : i32
      %27 = vector.broadcast %c4_i32_10 : i32 to vector<8x1xi32>
      %28 = arith.cmpi slt, %26, %27 : vector<8x1xi32>
      %cst_11 = arith.constant 0.000000e+00 : f32
      %29 = vector.shape_cast %28 : vector<8x1xi1> to vector<8x1xi1>
      %30 = vector.broadcast %29 : vector<8x1xi1> to vector<8x512xi1>
      %31 = vector.broadcast %cst_11 : f32 to vector<8x512xf32>
      %32 = arith.select %30, %22, %31 : vector<8x512xi1>, vector<8x512xf32>
      %33 = arith.mulf %32, %32 : vector<8x512xf32>
      %34 = vector.shape_cast %33 : vector<8x512xf32> to vector<1x8x512xf32>
      %cst_12 = arith.constant dense<0.000000e+00> : vector<8x512xf32>
      %35 = vector.multi_reduction <add>, %34, %cst_12 [0] : vector<1x8x512xf32> to vector<8x512xf32>
      %36 = arith.addf %15, %35 : vector<8x512xf32>
      %c1_i32_13 = arith.constant 1 : i32
      %37 = arith.addf %14, %36 : vector<8x512xf32>
      %c0_14 = arith.constant 0 : index
      %c0_15 = arith.constant 0 : index
      %c0_16 = arith.constant 0 : index
      %38 = vector.load %arg4[%c0_14, %c0_15, %c0_16] : memref<1x8x512xf32, #tpu.memory_space<vmem>>, vector<1x8x512xf32>
      %39 = vector.shape_cast %38 : vector<1x8x512xf32> to vector<8x512xf32>
      %40 = vector.shape_cast %37 : vector<8x512xf32> to vector<1x8x512xf32>
      tpu.vector_store %arg4[%c0_14, %c0_15, %c0_16], %40 {strides = array<i32>} : memref<1x8x512xf32, #tpu.memory_space<vmem>>, vector<1x8x512xf32>,
    } else {
    }
    %true = arith.constant true
    %10 = arith.xori %7, %true : i1
    %11 = arith.extui %10 : i1 to i32
    %c0_i32_3 = arith.constant 0 : i32
    %12 = arith.cmpi ne, %11, %c0_i32_3 : i32
    scf.if %12 {
      %c0 = arith.constant 0 : index
      %c0_4 = arith.constant 0 : index
      %c0_5 = arith.constant 0 : index
      %13 = vector.load %arg4[%c0, %c0_4, %c0_5] : memref<1x8x512xf32, #tpu.memory_space<vmem>>, vector<1x8x512xf32>
      %14 = vector.shape_cast %13 : vector<1x8x512xf32> to vector<8x512xf32>
      %cst = arith.constant 0.000000e+00 : f32
      %15 = vector.broadcast %cst : f32 to vector<8x512xf32>
      %c0_i32_6 = arith.constant 0 : i32
      %c8_i32_7 = arith.constant 8 : i32
      %16 = arith.muli %c0_i32_6, %c8_i32_7 : i32
      %17 = tpu.assume_multiple %16, 8 : i32
      %18 = arith.index_cast %17 : i32 to index
      %c0_8 = arith.constant 0 : index
      %19 = vector.load %arg2[%18, %c0_8] : memref<8x512xf32, #tpu.memory_space<vmem>>, vector<8x512xf32>
      %20 = arith.index_cast %17 : i32 to index
      %c0_9 = arith.constant 0 : index
      %21 = vector.load %arg3[%20, %c0_9] : memref<8x512xf32, #tpu.memory_space<vmem>>, vector<8x512xf32>
      %22 = arith.subf %19, %21 : vector<8x512xf32>
      %23 = arith.mulf %22, %22 : vector<8x512xf32>
      %24 = vector.shape_cast %23 : vector<8x512xf32> to vector<1x8x512xf32>
      %cst_10 = arith.constant dense<0.000000e+00> : vector<8x512xf32>
      %25 = vector.multi_reduction <add>, %24, %cst_10 [0] : vector<1x8x512xf32> to vector<8x512xf32>
      %26 = arith.addf %15, %25 : vector<8x512xf32>
      %c1_i32_11 = arith.constant 1 : i32
      %27 = arith.addf %14, %26 : vector<8x512xf32>
      %c0_12 = arith.constant 0 : index
      %c0_13 = arith.constant 0 : index
      %c0_14 = arith.constant 0 : index
      %28 = vector.load %arg4[%c0_12, %c0_13, %c0_14] : memref<1x8x512xf32, #tpu.memory_space<vmem>>, vector<1x8x512xf32>
      %29 = vector.shape_cast %28 : vector<1x8x512xf32> to vector<8x512xf32>
      %30 = vector.shape_cast %27 : vector<8x512xf32> to vector<1x8x512xf32>
      tpu.vector_store %arg4[%c0_12, %c0_13, %c0_14], %30 {strides = array<i32>} : memref<1x8x512xf32, #tpu.memory_space<vmem>>, vector<1x8x512xf32>,
    } else {
    }
    return
  }
  func.func @transform_0(%arg0: i32, %arg1: i32) -> (i32, i32) {
    %c1_i32 = arith.constant 1 : i32
    %0 = arith.muli %arg0, %c1_i32 : i32
    %1 = arith.addi %0, %arg1 : i32
    %c0_i32 = arith.constant 0 : i32
    %2 = arith.minsi %1, %c0_i32 : i32
    %c0_i32_0 = arith.constant 0 : i32
    %c0_i32_1 = arith.constant 0 : i32
    return %2, %c0_i32_0 : i32, i32
  }
  func.func @transform_1(%arg0: i32, %arg1: i32) -> (i32, i32) {
    %c1_i32 = arith.constant 1 : i32
    %0 = arith.muli %arg0, %c1_i32 : i32
    %1 = arith.addi %0, %arg1 : i32
    %c0_i32 = arith.constant 0 : i32
    %2 = arith.minsi %1, %c0_i32 : i32
    %c0_i32_0 = arith.constant 0 : i32
    %c0_i32_1 = arith.constant 0 : i32
    return %2, %c0_i32_0 : i32, i32
  }
  func.func @transform_2(%arg0: i32, %arg1: i32) -> (i32, i32, i32) {
    %c0_i32 = arith.constant 0 : i32
    %c0_i32_0 = arith.constant 0 : i32
    %c0_i32_1 = arith.constant 0 : i32
    return %arg0, %c0_i32, %c0_i32_0 : i32, i32, i32
  }
}

</mosaic_0001>

<llo_original>
// kernel: tpu_custom_call.1
$region0: #{tpu_custom_call.1}
  #allocation0 [shape = 'u32[]', space=smem, size = 0x4, offset = 0x4, fixed_abs, tag = 'smem constant byte address 0x4 - core index']
  #allocation1 [shape = 'u32[144,128]{1,0:T(1,128)}', space=vmem, size = 0x12000, scoped, tag = 'internal scratch']
  %s0 = inlined_call_operand.hbm [shape: f32[4,512], index: 0, kind: input, shape index: {}]
  %s1 = inlined_call_operand.hbm [shape: f32[4,512], index: 1, kind: input, shape index: {}]
  %s2 = inlined_call_operand.hbm [shape: f32[1,8,512], index: 2, kind: output, shape index: {}]
  %s3 = sld [smem:[#allocation0]]
  $region38: #{tpu_custom_call.1} parent=0
    _
  %s5 = ssub.s32 1, %s3
  %s6 = scalar_select 0, %s5, %s3
  $region1: #{tpu_custom_call.1} parent=0
    #allocation2 [shape = 'u8[16384]{0}', space=vmem, size = 0x4000, scoped, tag = 'input window, operand 0, single buffered']
    #allocation3 [shape = 's32[1]{0}', space=sflag, size = 0x4, scoped, tag = 'scoped memory for tpu_custom_call.1']
    #allocation4 [shape = 's32[1]{0}', space=sflag, size = 0x4, scoped, tag = 'scoped memory for tpu_custom_call.1']
    #allocation5 [shape = 'u8[16384]{0}', space=vmem, size = 0x4000, scoped, tag = 'input window, operand 1, single buffered']
    #allocation6 [shape = 's32[1]{0}', space=sflag, size = 0x4, scoped, tag = 'scoped memory for tpu_custom_call.1']
    #allocation7 [shape = 'u8[16384]{0}', space=vmem, size = 0x4000, scoped, tag = 'output window, operand 0, single buffered']
    %7 = vsyncpa [#allocation3], 0
    %8 = vsyncpa [#allocation6], 0
    %9 = vsyncpa [#allocation4], 0
    // Predicated region
    $region2: #{tpu_custom_call.1} parent=1 // pred_check
      _
    $region3: #{tpu_custom_call.1} parent=1 // pred_check_branch
      %11 = sbr.rel (0) target = $region5
    $region4: #{tpu_custom_call.1} parent=1 // pred_region
      %s12 = sadd.s32 0, 0
      %p13 = scmp.lt.s32.totalorder %s12, 0
      %s14 = scalar_select %p13, %s12, 0
      %s15 = smul.u32 2, %s14
      %s16 = ssub.s32 1, %s15
      %s17 = smul.u32 64, %s16
      %s18 = smul.u32 %s17, 4
      %s20 = ssub.s32 512, %s18
      %21 = vsyncadd [#allocation3], %s20
      %p22 = scmp.ne.s32.totalorder 0, %s18
      %s23 = smul.addr %s15, 4
      %s24 = smul.addr %s23, 64
      %s25 = scalar_lea.hbm %s0, %s24
      %s26 = smul.u32 16, %s16
      %s27 = sshll.u32 [#allocation2], 4
      %s28 = int_to_ptr.vmem [resolvable:$true] %s27
      %s29 = sshll.u32 %s26, 4
      %33 = dma.hbm_to_vmem [thread:$0]  (%p22), %s25, %s29, %s28, [#allocation3], 256, 256, 16
    $region5: #{tpu_custom_call.1} parent=1 // pred_fallthru
      _
    // Predicated region
    $region6: #{tpu_custom_call.1} parent=1 // pred_check
      _
    $region7: #{tpu_custom_call.1} parent=1 // pred_check_branch
      %35 = sbr.rel (0) target = $region9
    $region8: #{tpu_custom_call.1} parent=1 // pred_region
      %s36 = sadd.s32 0, 0
      %p37 = scmp.lt.s32.totalorder %s36, 0
      %s38 = scalar_select %p37, %s36, 0
      %s39 = smul.u32 2, %s38
      %s40 = ssub.s32 1, %s39
      %s41 = smul.u32 64, %s40
      %s42 = smul.u32 %s41, 4
      %s44 = ssub.s32 512, %s42
      %45 = vsyncadd [#allocation6], %s44
      %p46 = scmp.ne.s32.totalorder 0, %s42
      %s47 = smul.addr %s39, 4
      %s48 = smul.addr %s47, 64
      %s49 = scalar_lea.hbm %s1, %s48
      %s50 = smul.u32 16, %s40
      %s51 = sshll.u32 [#allocation5], 4
      %s52 = int_to_ptr.vmem [resolvable:$true] %s51
      %s53 = sshll.u32 %s50, 4
      %57 = dma.hbm_to_vmem [thread:$0]  (%p46), %s49, %s53, %s52, [#allocation6], 256, 256, 16
    $region9: #{tpu_custom_call.1} parent=1 // pred_fallthru
      _
    // Predicated region
    $region10: #{tpu_custom_call.1} parent=1 // pred_check
      _
    $region11: #{tpu_custom_call.1} parent=1 // pred_check_branch
      %59 = sbr.rel (0) target = $region13
    $region12: #{tpu_custom_call.1} parent=1 // pred_region
      %60 = dma.done [#allocation3], 512
    $region13: #{tpu_custom_call.1} parent=1 // pred_fallthru
      _
    // Predicated region
    $region14: #{tpu_custom_call.1} parent=1 // pred_check
      _
    $region15: #{tpu_custom_call.1} parent=1 // pred_check_branch
      %62 = sbr.rel (0) target = $region17
    $region16: #{tpu_custom_call.1} parent=1 // pred_region
      %63 = dma.done [#allocation6], 512
    $region17: #{tpu_custom_call.1} parent=1 // pred_fallthru
      _
    %s64 = sadd.s32 0, 0
    %p65 = scmp.lt.s32.totalorder %s64, 0
    %s66 = scalar_select %p65, %s64, 0
    %s67 = smul.u32 2, %s66
    %s68 = ssub.s32 1, %s67
    %s69 = smul.u32 64, %s68
    %s70 = smul.u32 %s69, 4
    %s71 = sadd.s32 0, 0
    %p72 = scmp.lt.s32.totalorder %s71, 0
    %s73 = scalar_select %p72, %s71, 0
    %s74 = smul.u32 2, %s73
    %s75 = ssub.s32 1, %s74
    %s76 = smul.u32 64, %s75
    %s77 = smul.u32 %s76, 4
    %p78 = scmp.eq.s32.totalorder 0, 0
    // Predicated region
    $region18: #{tpu_custom_call.1} parent=1 // pred_check
      %p79 = pneg %p78
    $region19: #{tpu_custom_call.1} parent=1 // pred_check_branch
      %81 = sbr.rel (%p79) target = $region21
    $region20: #{tpu_custom_call.1} parent=1 // pred_region
      %82 = vst [vmem:[#allocation7] sm:$0xff] 0.0
      %83 = vst [vmem:[#allocation7 + $0x8] sm:$0xff] 0.0
      %84 = vst [vmem:[#allocation7 + $0x10] sm:$0xff] 0.0
      %85 = vst [vmem:[#allocation7 + $0x18] sm:$0xff] 0.0
    $region21: #{tpu_custom_call.1} parent=1 // pred_fallthru
      _
    %s86 = sadd.s32 0, 0
    %s87 = smul.u32 %s86, 8
    %s88 = sadd.s32 %s87, 8
    %p89 = scmp.gt.s32.totalorder %s88, 4
    // Predicated region
    $region22: #{tpu_custom_call.1} parent=1 // pred_check
      %p90 = pneg %p89
    $region23: #{tpu_custom_call.1} parent=1 // pred_check_branch
      %92 = sbr.rel (%p90) target = $region25
    $region24: #{tpu_custom_call.1} parent=1 // pred_region
      %v93 = vld [vmem:[#allocation7] sm:$0xff]
      %v94 = vld [vmem:[#allocation7 + $0x8] sm:$0xff]
      %v95 = vld [vmem:[#allocation7 + $0x10] sm:$0xff]
      %v96 = vld [vmem:[#allocation7 + $0x18] sm:$0xff]
      %s97 = smul.u32 0, 4
      %s98 = smul.addr %s97, 4
      %s99 = scalar_lea.vmem [#allocation2], %s98
      %v100 = vld [vmem:[%s99] sm:$0xff]
      %v101 = vld [vmem:[%s99 + $0x8] sm:$0xff]
      %v102 = vld [vmem:[%s99 + $0x10] sm:$0xff]
      %v103 = vld [vmem:[%s99 + $0x18] sm:$0xff]
      %s104 = smul.addr %s97, 4
      %s105 = scalar_lea.vmem [#allocation5], %s104
      %v106 = vld [vmem:[%s105] sm:$0xff]
      %v107 = vld [vmem:[%s105 + $0x8] sm:$0xff]
      %v108 = vld [vmem:[%s105 + $0x10] sm:$0xff]
      %v109 = vld [vmem:[%s105 + $0x18] sm:$0xff]
      %v110 = vsub.f32 %v100, %v106
      %v111 = vsub.f32 %v101, %v107
      %v112 = vsub.f32 %v102, %v108
      %v113 = vsub.f32 %v103, %v109
      %s114 = sadd.s32 %s87, 0
      %v115 = vlaneseq
      %v116 = vshrl.u32 %v115, 7
      %v117 = vstv %s114
      %v118 = vadd.s32 %v117, %v116
      %vm119 = vcmp.lt.s32.totalorder %v118, 4
      %v120 = vsel %vm119, 1, 0
      %vm121 = vcmp.eq.s32.totalorder %v120, 1
      %v126 = vcombine.low %v110, %v112
      %v127 = vcombine.high %v110, %v112
      %v128 = vcombine.low %v111, %v113
      %v129 = vcombine.high %v111, %v113
      %v134 = vsel %vm121, %v126, 0.0
      %v135 = vsel %vm121, %v127, 0.0
      %v136 = vsel %vm121, %v128, 0.0
      %v137 = vsel %vm121, %v129, 0.0
      %v138 = vmul.f32 %v134, %v134
      %v139 = vmul.f32 %v135, %v135
      %v140 = vmul.f32 %v136, %v136
      %v141 = vmul.f32 %v137, %v137
      %v142 = vadd.f32 %v138, 0.0
      %v143 = vadd.f32 %v139, 0.0
      %v144 = vadd.f32 %v140, 0.0
      %v145 = vadd.f32 %v141, 0.0
      %v146 = vadd.f32 %v142, 0.0
      %v147 = vadd.f32 %v143, 0.0
      %v148 = vadd.f32 %v144, 0.0
      %v149 = vadd.f32 %v145, 0.0
      %v150 = vadd.f32 %v93, %v146
      %v151 = vadd.f32 %v94, %v147
      %v152 = vadd.f32 %v95, %v148
      %v153 = vadd.f32 %v96, %v149
      %154 = vst [vmem:[#allocation7] sm:$0xff] %v150
      %155 = vst [vmem:[#allocation7 + $0x8] sm:$0xff] %v151
      %156 = vst [vmem:[#allocation7 + $0x10] sm:$0xff] %v152
      %157 = vst [vmem:[#allocation7 + $0x18] sm:$0xff] %v153
    $region25: #{tpu_custom_call.1} parent=1 // pred_fallthru
      _
    %p158 = scmp.le.s32.totalorder %s88, 4
    // Predicated region
    $region26: #{tpu_custom_call.1} parent=1 // pred_check
      %p159 = pneg %p158
    $region27: #{tpu_custom_call.1} parent=1 // pred_check_branch
      %161 = sbr.rel (%p159) target = $region29
    $region28: #{tpu_custom_call.1} parent=1 // pred_region
      %v162 = vld [vmem:[#allocation7] sm:$0xff]
      %v163 = vld [vmem:[#allocation7 + $0x8] sm:$0xff]
      %v164 = vld [vmem:[#allocation7 + $0x10] sm:$0xff]
      %v165 = vld [vmem:[#allocation7 + $0x18] sm:$0xff]
      %s166 = smul.u32 0, 4
      %s167 = smul.addr %s166, 4
      %s168 = scalar_lea.vmem [#allocation2], %s167
      %v169 = vld [vmem:[%s168] sm:$0xff]
      %v170 = vld [vmem:[%s168 + $0x8] sm:$0xff]
      %v171 = vld [vmem:[%s168 + $0x10] sm:$0xff]
      %v172 = vld [vmem:[%s168 + $0x18] sm:$0xff]
      %s173 = smul.addr %s166, 4
      %s174 = scalar_lea.vmem [#allocation5], %s173
      %v175 = vld [vmem:[%s174] sm:$0xff]
      %v176 = vld [vmem:[%s174 + $0x8] sm:$0xff]
      %v177 = vld [vmem:[%s174 + $0x10] sm:$0xff]
      %v178 = vld [vmem:[%s174 + $0x18] sm:$0xff]
      %v179 = vsub.f32 %v169, %v175
      %v180 = vsub.f32 %v170, %v176
      %v181 = vsub.f32 %v171, %v177
      %v182 = vsub.f32 %v172, %v178
      %v183 = vmul.f32 %v179, %v179
      %v184 = vmul.f32 %v180, %v180
      %v185 = vmul.f32 %v181, %v181
      %v186 = vmul.f32 %v182, %v182
      %v187 = vadd.f32 %v183, 0.0
      %v188 = vadd.f32 %v184, 0.0
      %v189 = vadd.f32 %v185, 0.0
      %v190 = vadd.f32 %v186, 0.0
      %v191 = vadd.f32 %v187, 0.0
      %v192 = vadd.f32 %v188, 0.0
      %v193 = vadd.f32 %v189, 0.0
      %v194 = vadd.f32 %v190, 0.0
      %v199 = vcombine.low %v191, %v193
      %v200 = vcombine.high %v191, %v193
      %v201 = vcombine.low %v192, %v194
      %v202 = vcombine.high %v192, %v194
      %v207 = vadd.f32 %v162, %v199
      %v208 = vadd.f32 %v163, %v200
      %v209 = vadd.f32 %v164, %v201
      %v210 = vadd.f32 %v165, %v202
      %211 = vst [vmem:[#allocation7] sm:$0xff] %v207
      %212 = vst [vmem:[#allocation7 + $0x8] sm:$0xff] %v208
      %213 = vst [vmem:[#allocation7 + $0x10] sm:$0xff] %v209
      %214 = vst [vmem:[#allocation7 + $0x18] sm:$0xff] %v210
    $region29: #{tpu_custom_call.1} parent=1 // pred_fallthru
      _
    // Predicated region
    $region30: #{tpu_custom_call.1} parent=1 // pred_check
      _
    $region31: #{tpu_custom_call.1} parent=1 // pred_check_branch
      %216 = sbr.rel (0) target = $region33
    $region32: #{tpu_custom_call.1} parent=1 // pred_region
      %s218 = ssub.s32 512, 512
      %219 = vsyncadd [#allocation4], %s218
      %s221 = sshll.u32 [#allocation7], 4
      %s222 = int_to_ptr.vmem [resolvable:$true] %s221
      %224 = dma.vmem_to_hbm [thread:$0]  %s222, 512, %s2, [#allocation4]
    $region33: #{tpu_custom_call.1} parent=1 // pred_fallthru
      _
    // Predicated region
    $region34: #{tpu_custom_call.1} parent=1 // pred_check
      _
    $region35: #{tpu_custom_call.1} parent=1 // pred_check_branch
      %226 = sbr.rel (0) target = $region37
    $region36: #{tpu_custom_call.1} parent=1 // pred_region
      %227 = dma.done [#allocation4], 512
    $region37: #{tpu_custom_call.1} parent=1 // pred_fallthru
      _
    %228 = vsyncpa [#allocation3], 1
    %229 = vsyncpa [#allocation6], 1
    %230 = vsyncpa [#allocation4], 1

</llo_original>
